<compile_context>
chip_gen: v7x
topology: tpu7x:2x2x1
jax: 0.10.0
libtpu: 0.0.40
codegen_flags: <defaults>
</compile_context>

<pallas_src>
import numpy as np
import jax
import jax.numpy as jnp
from jax.experimental import pallas as pl
from jax.experimental.pallas import tpu as pltpu


def _build_chains(Nsteps=0):
    """Mirror CounterFrequency.__init__: three sequential (threshold, value) chains.

    nn.Threshold(t, v): y = x if x > t else v, applied sequentially.
    """
    if Nsteps > 0:
        # NOTE: PyTorch divides by (Nsteps - 1); Nsteps == 1 would raise
        # ZeroDivisionError at construction. We guard it here (documented
        # divergence) instead of crashing.
        denom = max(Nsteps - 1, 1)
        chain = [((i + 1) / Nsteps - 1.0, 1.0 - i / denom) for i in range(Nsteps)]
        chains = [list(chain), list(chain), list(chain)]
    else:
        def make(thresholds):
            L = len(thresholds)
            return [(-t, (L - 1 - idx) / (L - 1)) for idx, t in enumerate(thresholds)]
        chains = [
            make([0.75, 0.6, 0.5, 0.4, 0.3, 0.2, 0.0]),
            make([0.75, 0.6, 0.5, 0.4, 0.3, 0.2, 0.0]),
            make([0.65, 0.5, 0.4, 0.3, 0.2, 0.1, 0.0]),
        ]
    return chains, len(chains[0])


def _per_row_tables(N, C, chains, n_steps):
    """Per-row (N*C) f32 tables: thresholds, values, and an 'active' flag."""
    thr_c = np.zeros((C, n_steps), dtype=np.float32)
    val_c = np.zeros((C, n_steps), dtype=np.float32)
    act_c = np.zeros((C, 1), dtype=np.float32)
    for c in range(min(3, C)):
        act_c[c, 0] = 1.0
        for s, (t, v) in enumerate(chains[c]):
            thr_c[c, s] = t
            val_c[c, s] = v
    # Row r of x.reshape(N*C, H*W) corresponds to channel r % C.
    thr_r = np.tile(thr_c, (N, 1))
    val_r = np.tile(val_c, (N, 1))
    act_r = np.tile(act_c, (N, 1))
    return jnp.asarray(thr_r), jnp.asarray(val_r), jnp.asarray(act_r)


def _round_up(a, b):
    return (a + b - 1) // b * b


def _vmem_params():
    """Generation-aware (tile target bytes, scoped VMEM limit bytes)."""
    try:
        kind = jax.devices()[0].device_kind.lower()
    except Exception:  # pragma: no cover - defensive
        kind = ""
    if "v7" in kind:
        # 64 MiB physical per TC: ~4 MiB tiles, double-buffered in+out ~16 MiB.
        return 4 << 20, 48 << 20
    if "v6" in kind:
        # 128 MiB physical: bigger tiles amortize per-step overhead.
        return 4 << 20, 64 << 20
    if "v5" in kind:
        # ~0.82 TB/s HBM: already mem-bound, modest tiles suffice.
        return 2 << 20, 32 << 20
    return 2 << 20, 64 << 20


def _choose_tiles(NC, HW, itemsize, target_bytes):
    """Pick a ~target_bytes (TR, TW) block, (8,128)-granular, lane-dense."""
    target = max(target_bytes // itemsize, 8 * 128)
    nc8 = _round_up(NC, 8)
    if HW <= target // 8:
        tw = HW                                    # full rows -> contiguous DMA
        tr = min(nc8, max(8, (target // max(HW, 1)) // 8 * 8))
    else:
        tr = min(nc8, 8)
        tw = min(_round_up(HW, 128), max(128, (target // tr) // 128 * 128))
    return tr, tw


def _make_kernel(n_steps, needs_mask):
    def kernel(*refs):
        if needs_mask:
            x_ref, thr_ref, val_ref, act_ref, o_ref = refs
        else:
            x_ref, thr_ref, val_ref, o_ref = refs

        # x_ref / o_ref: (TR, TW) tile of the flattened (N*C, H*W) view.
        # thr_ref / val_ref: (TR, n_steps); act_ref: (TR, 1) per-row params.
        z0 = -x_ref[...].astype(jnp.float32)        # forward starts with x = -x
        z = z0
        for s in range(n_steps):                    # sequential nn.Threshold chain
            t = thr_ref[:, s:s + 1]                 # (TR, 1) broadcasts over lanes
            v = val_ref[:, s:s + 1]                 # (TR, 1)
            # nn.Threshold: keep z where z > t, else v (NaN is replaced too).
            z = jnp.where(z > t, z, v)
        if needs_mask:
            # Channels >= 3 are only negated, never rewritten: single blend
            # against the kept-live z0 (preserves NaN exactly for those rows).
            z = jnp.where(act_ref[...] > 0.5, z, z0)
        o_ref[...] = z.astype(o_ref.dtype)
    return kernel


def counter_frequency(x, Nsteps=0):
    N, C, H, W = x.shape
    NC, HW = N * C, H * W
    chains, n_steps = _build_chains(Nsteps)
    thr, val, act = _per_row_tables(N, C, chains, n_steps)
    needs_mask = C > 3                               # C <= 3: every row active

    x2d = x.reshape(NC, HW)                          # free: NCHW is contiguous
    target_bytes, vmem_limit = _vmem_params()
    tr, tw = _choose_tiles(NC, HW, x.dtype.itemsize, target_bytes)
    grid = (pl.cdiv(NC, tr), pl.cdiv(HW, tw))        # lane axis (j) innermost

    itemsize = x.dtype.itemsize
    table_bytes = 4 * (thr.size + val.size + (act.size if needs_mask else 0))
    cost = pl.CostEstimate(
        flops=(1 + 2 * n_steps + (1 if needs_mask else 0)) * NC * HW,
        transcendentals=0,
        bytes_accessed=2 * itemsize * NC * HW + table_bytes,
    )

    in_specs = [
        pl.BlockSpec((tr, tw), lambda i, j: (i, j)),
        pl.BlockSpec((tr, n_steps), lambda i, j: (i, 0)),   # resident across j
        pl.BlockSpec((tr, n_steps), lambda i, j: (i, 0)),
    ]
    args = [x2d, thr, val]
    if needs_mask:
        in_specs.append(pl.BlockSpec((tr, 1), lambda i, j: (i, 0)))
        args.append(act)

    out2d = pl.pallas_call(
        _make_kernel(n_steps, needs_mask),
        out_shape=jax.ShapeDtypeStruct((NC, HW), x.dtype),
        grid_spec=pltpu.PrefetchScalarGridSpec(
            num_scalar_prefetch=0,
            grid=grid,
            in_specs=in_specs,
            out_specs=pl.BlockSpec((tr, tw), lambda i, j: (i, j)),
        ),
        compiler_params=pltpu.CompilerParams(
            dimension_semantics=("parallel", "parallel"),
            vmem_limit_bytes=vmem_limit),
        cost_estimate=cost,
    )(*args)
    return out2d.reshape(N, C, H, W)


def counter_frequency_ref(x, Nsteps=0):
    """Pure-JAX reference mirroring the PyTorch forward (for correctness check)."""
    chains, _ = _build_chains(Nsteps)
    z = -x
    C = x.shape[1]
    outs = []
    for c in range(C):
        zc = z[:, c]
        if c < 3:
            for (t, v) in chains[c]:
                zc = jnp.where(zc > jnp.asarray(t, zc.dtype),
                               zc, jnp.asarray(v, zc.dtype))
        outs.append(zc)
    return jnp.stack(outs, axis=1)


if __name__ == "__main__":
    key = jax.random.PRNGKey(0)
    x = jax.random.normal(key, (2, 4, 16, 16), dtype=jnp.float32)

    out = counter_frequency(x)
    out = jax.block_until_ready(out)

    ref = counter_frequency_ref(x)
    assert out.shape == x.shape and out.dtype == x.dtype
    np.testing.assert_allclose(np.asarray(out), np.asarray(ref), rtol=0, atol=0)

    # Also exercise the C <= 3 specialization (no mask / no act table).
    x3 = jax.random.normal(jax.random.PRNGKey(1), (2, 3, 16, 16), dtype=jnp.float32)
    out3 = jax.block_until_ready(counter_frequency(x3))
    np.testing.assert_allclose(np.asarray(out3), np.asarray(counter_frequency_ref(x3)),
                               rtol=0, atol=0)

    print("KERNEL_OK")
</pallas_src>

<mosaic_0001>
module attributes {stable_mosaic.version = 11 : i64} {
  func.func @kernel(%arg0: i32, %arg1: i32, %arg2: memref<8x256xf32, #tpu.memory_space<vmem>>, %arg3: memref<8x7xf32, #tpu.memory_space<vmem>>, %arg4: memref<8x7xf32, #tpu.memory_space<vmem>>, %arg5: memref<8x1xf32, #tpu.memory_space<vmem>>, %arg6: memref<8x256xf32, #tpu.memory_space<vmem>>) attributes {dimension_semantics = [#tpu.dimension_semantics<parallel>, #tpu.dimension_semantics<parallel>], iteration_bounds = array<i64: 1, 1>, scalar_prefetch = 0 : i64, scratch_operands = 0 : i64, tpu.core_type = #tpu.core_type<tc>, window_params = [{transform_indices = @transform_0, window_bounds = array<i64: 8, 256>}, {transform_indices = @transform_1, window_bounds = array<i64: 8, 7>}, {transform_indices = @transform_2, window_bounds = array<i64: 8, 7>}, {transform_indices = @transform_3, window_bounds = array<i64: 8, 1>}, {transform_indices = @transform_4, window_bounds = array<i64: 8, 256>}]} {
    %c0 = arith.constant 0 : index
    %c0_0 = arith.constant 0 : index
    %0 = vector.load %arg2[%c0, %c0_0] : memref<8x256xf32, #tpu.memory_space<vmem>>, vector<8x256xf32>
    %cst = arith.constant 0.000000e+00 : f32
    %1 = vector.broadcast %cst : f32 to vector<8x256xf32>
    %2 = arith.subf %1, %0 : vector<8x256xf32>
    %c0_1 = arith.constant 0 : index
    %c0_2 = arith.constant 0 : index
    %3 = vector.load %arg3[%c0_1, %c0_2] : memref<8x7xf32, #tpu.memory_space<vmem>>, vector<8x1xf32>
    %c0_3 = arith.constant 0 : index
    %c0_4 = arith.constant 0 : index
    %4 = vector.load %arg4[%c0_3, %c0_4] : memref<8x7xf32, #tpu.memory_space<vmem>>, vector<8x1xf32>
    %5 = vector.broadcast %3 : vector<8x1xf32> to vector<8x256xf32>
    %6 = arith.cmpf ogt, %2, %5 : vector<8x256xf32>
    %7 = vector.shape_cast %4 : vector<8x1xf32> to vector<8x1xf32>
    %8 = vector.broadcast %7 : vector<8x1xf32> to vector<8x256xf32>
    %9 = arith.select %6, %2, %8 : vector<8x256xi1>, vector<8x256xf32>
    %c0_5 = arith.constant 0 : index
    %c1 = arith.constant 1 : index
    %10 = vector.load %arg3[%c0_5, %c1] : memref<8x7xf32, #tpu.memory_space<vmem>>, vector<8x1xf32>
    %c0_6 = arith.constant 0 : index
    %c1_7 = arith.constant 1 : index
    %11 = vector.load %arg4[%c0_6, %c1_7] : memref<8x7xf32, #tpu.memory_space<vmem>>, vector<8x1xf32>
    %12 = vector.broadcast %10 : vector<8x1xf32> to vector<8x256xf32>
    %13 = arith.cmpf ogt, %9, %12 : vector<8x256xf32>
    %14 = vector.shape_cast %11 : vector<8x1xf32> to vector<8x1xf32>
    %15 = vector.broadcast %14 : vector<8x1xf32> to vector<8x256xf32>
    %16 = arith.select %13, %9, %15 : vector<8x256xi1>, vector<8x256xf32>
    %c0_8 = arith.constant 0 : index
    %c2 = arith.constant 2 : index
    %17 = vector.load %arg3[%c0_8, %c2] : memref<8x7xf32, #tpu.memory_space<vmem>>, vector<8x1xf32>
    %c0_9 = arith.constant 0 : index
    %c2_10 = arith.constant 2 : index
    %18 = vector.load %arg4[%c0_9, %c2_10] : memref<8x7xf32, #tpu.memory_space<vmem>>, vector<8x1xf32>
    %19 = vector.broadcast %17 : vector<8x1xf32> to vector<8x256xf32>
    %20 = arith.cmpf ogt, %16, %19 : vector<8x256xf32>
    %21 = vector.shape_cast %18 : vector<8x1xf32> to vector<8x1xf32>
    %22 = vector.broadcast %21 : vector<8x1xf32> to vector<8x256xf32>
    %23 = arith.select %20, %16, %22 : vector<8x256xi1>, vector<8x256xf32>
    %c0_11 = arith.constant 0 : index
    %c3 = arith.constant 3 : index
    %24 = vector.load %arg3[%c0_11, %c3] : memref<8x7xf32, #tpu.memory_space<vmem>>, vector<8x1xf32>
    %c0_12 = arith.constant 0 : index
    %c3_13 = arith.constant 3 : index
    %25 = vector.load %arg4[%c0_12, %c3_13] : memref<8x7xf32, #tpu.memory_space<vmem>>, vector<8x1xf32>
    %26 = vector.broadcast %24 : vector<8x1xf32> to vector<8x256xf32>
    %27 = arith.cmpf ogt, %23, %26 : vector<8x256xf32>
    %28 = vector.shape_cast %25 : vector<8x1xf32> to vector<8x1xf32>
    %29 = vector.broadcast %28 : vector<8x1xf32> to vector<8x256xf32>
    %30 = arith.select %27, %23, %29 : vector<8x256xi1>, vector<8x256xf32>
    %c0_14 = arith.constant 0 : index
    %c4 = arith.constant 4 : index
    %31 = vector.load %arg3[%c0_14, %c4] : memref<8x7xf32, #tpu.memory_space<vmem>>, vector<8x1xf32>
    %c0_15 = arith.constant 0 : index
    %c4_16 = arith.constant 4 : index
    %32 = vector.load %arg4[%c0_15, %c4_16] : memref<8x7xf32, #tpu.memory_space<vmem>>, vector<8x1xf32>
    %33 = vector.broadcast %31 : vector<8x1xf32> to vector<8x256xf32>
    %34 = arith.cmpf ogt, %30, %33 : vector<8x256xf32>
    %35 = vector.shape_cast %32 : vector<8x1xf32> to vector<8x1xf32>
    %36 = vector.broadcast %35 : vector<8x1xf32> to vector<8x256xf32>
    %37 = arith.select %34, %30, %36 : vector<8x256xi1>, vector<8x256xf32>
    %c0_17 = arith.constant 0 : index
    %c5 = arith.constant 5 : index
    %38 = vector.load %arg3[%c0_17, %c5] : memref<8x7xf32, #tpu.memory_space<vmem>>, vector<8x1xf32>
    %c0_18 = arith.constant 0 : index
    %c5_19 = arith.constant 5 : index
    %39 = vector.load %arg4[%c0_18, %c5_19] : memref<8x7xf32, #tpu.memory_space<vmem>>, vector<8x1xf32>
    %40 = vector.broadcast %38 : vector<8x1xf32> to vector<8x256xf32>
    %41 = arith.cmpf ogt, %37, %40 : vector<8x256xf32>
    %42 = vector.shape_cast %39 : vector<8x1xf32> to vector<8x1xf32>
    %43 = vector.broadcast %42 : vector<8x1xf32> to vector<8x256xf32>
    %44 = arith.select %41, %37, %43 : vector<8x256xi1>, vector<8x256xf32>
    %c0_20 = arith.constant 0 : index
    %c6 = arith.constant 6 : index
    %45 = vector.load %arg3[%c0_20, %c6] : memref<8x7xf32, #tpu.memory_space<vmem>>, vector<8x1xf32>
    %c0_21 = arith.constant 0 : index
    %c6_22 = arith.constant 6 : index
    %46 = vector.load %arg4[%c0_21, %c6_22] : memref<8x7xf32, #tpu.memory_space<vmem>>, vector<8x1xf32>
    %47 = vector.broadcast %45 : vector<8x1xf32> to vector<8x256xf32>
    %48 = arith.cmpf ogt, %44, %47 : vector<8x256xf32>
    %49 = vector.shape_cast %46 : vector<8x1xf32> to vector<8x1xf32>
    %50 = vector.broadcast %49 : vector<8x1xf32> to vector<8x256xf32>
    %51 = arith.select %48, %44, %50 : vector<8x256xi1>, vector<8x256xf32>
    %c0_23 = arith.constant 0 : index
    %c0_24 = arith.constant 0 : index
    %52 = vector.load %arg5[%c0_23, %c0_24] : memref<8x1xf32, #tpu.memory_space<vmem>>, vector<8x1xf32>
    %cst_25 = arith.constant 5.000000e-01 : f32
    %53 = vector.broadcast %cst_25 : f32 to vector<8x1xf32>
    %54 = arith.cmpf ogt, %52, %53 : vector<8x1xf32>
    %55 = vector.shape_cast %54 : vector<8x1xi1> to vector<8x1xi1>
    %56 = vector.broadcast %55 : vector<8x1xi1> to vector<8x256xi1>
    %57 = arith.select %56, %51, %2 : vector<8x256xi1>, vector<8x256xf32>
    %c0_26 = arith.constant 0 : index
    %c0_27 = arith.constant 0 : index
    %58 = vector.load %arg6[%c0_26, %c0_27] : memref<8x256xf32, #tpu.memory_space<vmem>>, vector<8x256xf32>
    tpu.vector_store %arg6[%c0_26, %c0_27], %57 {strides = array<i32>} : memref<8x256xf32, #tpu.memory_space<vmem>>, vector<8x256xf32>,
    return
  }
  func.func @transform_0(%arg0: i32, %arg1: i32) -> (i32, i32) {
    %c0_i32 = arith.constant 0 : i32
    return %arg0, %arg1 : i32, i32
  }
  func.func @transform_1(%arg0: i32, %arg1: i32) -> (i32, i32) {
    %c0_i32 = arith.constant 0 : i32
    %c0_i32_0 = arith.constant 0 : i32
    return %arg0, %c0_i32 : i32, i32
  }
  func.func @transform_2(%arg0: i32, %arg1: i32) -> (i32, i32) {
    %c0_i32 = arith.constant 0 : i32
    %c0_i32_0 = arith.constant 0 : i32
    return %arg0, %c0_i32 : i32, i32
  }
  func.func @transform_3(%arg0: i32, %arg1: i32) -> (i32, i32) {
    %c0_i32 = arith.constant 0 : i32
    %c0_i32_0 = arith.constant 0 : i32
    return %arg0, %c0_i32 : i32, i32
  }
  func.func @transform_4(%arg0: i32, %arg1: i32) -> (i32, i32) {
    %c0_i32 = arith.constant 0 : i32
    return %arg0, %arg1 : i32, i32
  }
}

</mosaic_0001>

<llo_original>
// kernel: tpu_custom_call.1
$region0: #{tpu_custom_call.1}
  #allocation0 [shape = 'u32[]', space=smem, size = 0x4, offset = 0x4, fixed_abs, tag = 'smem constant byte address 0x4 - core index']
  #allocation1 [shape = 'u32[144,128]{1,0:T(1,128)}', space=vmem, size = 0x12000, scoped, tag = 'internal scratch']
  %s0 = inlined_call_operand.hbm [shape: f32[8,256], index: 0, kind: input, shape index: {}]
  %s1 = inlined_call_operand.hbm [shape: f32[8,7], index: 1, kind: input, shape index: {}]
  %s2 = inlined_call_operand.hbm [shape: f32[8,7], index: 2, kind: input, shape index: {}]
  %s3 = inlined_call_operand.hbm [shape: f32[8,1], index: 3, kind: input, shape index: {}]
  %s4 = inlined_call_operand.hbm [shape: f32[8,256], index: 4, kind: output, shape index: {}]
  %s5 = sld [smem:[#allocation0]]
  $region42: #{tpu_custom_call.1} parent=0
    _
  %s7 = ssub.s32 1, %s5
  %s8 = scalar_select 0, %s7, %s5
  $region1: #{tpu_custom_call.1} parent=0
    #allocation2 [shape = 'u8[8192]{0}', space=vmem, size = 0x2000, scoped, tag = 'input window, operand 0, single buffered']
    #allocation3 [shape = 's32[1]{0}', space=sflag, size = 0x4, scoped, tag = 'scoped memory for tpu_custom_call.1']
    #allocation4 [shape = 's32[1]{0}', space=sflag, size = 0x4, scoped, tag = 'scoped memory for tpu_custom_call.1']
    #allocation5 [shape = 'u8[4096]{0}', space=vmem, size = 0x1000, scoped, tag = 'input window, operand 1, single buffered']
    #allocation6 [shape = 's32[1]{0}', space=sflag, size = 0x4, scoped, tag = 'scoped memory for tpu_custom_call.1']
    #allocation7 [shape = 'u8[4096]{0}', space=vmem, size = 0x1000, scoped, tag = 'input window, operand 2, single buffered']
    #allocation8 [shape = 'u8[4096]{0}', space=vmem, size = 0x1000, scoped, tag = 'input window, operand 3, single buffered']
    #allocation9 [shape = 's32[1]{0}', space=sflag, size = 0x4, scoped, tag = 'scoped memory for tpu_custom_call.1']
    #allocation10 [shape = 'u8[8192]{0}', space=vmem, size = 0x2000, scoped, tag = 'output window, operand 0, single buffered']
    %9 = vsyncpa [#allocation3], 0
    %10 = vsyncpa [#allocation6], 0
    %11 = vsyncpa [#allocation9], 0
    %12 = vsyncpa [#allocation4], 0
    // Predicated region
    $region2: #{tpu_custom_call.1} parent=1 // pred_check
      _
    $region3: #{tpu_custom_call.1} parent=1 // pred_check_branch
      %14 = sbr.rel (0) target = $region5
    $region4: #{tpu_custom_call.1} parent=1 // pred_region
      %s16 = ssub.s32 256, 256
      %17 = vsyncadd [#allocation3], %s16
      %s19 = sshll.u32 [#allocation2], 4
      %s20 = int_to_ptr.vmem [resolvable:$true] %s19
      %22 = dma.hbm_to_vmem [thread:$0]  %s0, 256, %s20, [#allocation3]
    $region5: #{tpu_custom_call.1} parent=1 // pred_fallthru
      _
    // Predicated region
    $region6: #{tpu_custom_call.1} parent=1 // pred_check
      _
    $region7: #{tpu_custom_call.1} parent=1 // pred_check_branch
      %24 = sbr.rel (0) target = $region9
    $region8: #{tpu_custom_call.1} parent=1 // pred_region
      %s26 = ssub.s32 128, 128
      %27 = vsyncadd [#allocation6], %s26
      %s29 = sshll.u32 [#allocation5], 4
      %s30 = int_to_ptr.vmem [resolvable:$true] %s29
      %32 = dma.hbm_to_vmem [thread:$0]  %s1, 128, %s30, [#allocation6]
    $region9: #{tpu_custom_call.1} parent=1 // pred_fallthru
      _
    // Predicated region
    $region10: #{tpu_custom_call.1} parent=1 // pred_check
      _
    $region11: #{tpu_custom_call.1} parent=1 // pred_check_branch
      %34 = sbr.rel (0) target = $region13
    $region12: #{tpu_custom_call.1} parent=1 // pred_region
      %s36 = ssub.s32 128, 128
      %37 = vsyncadd [#allocation6], %s36
      %s39 = sshll.u32 [#allocation7], 4
      %s40 = int_to_ptr.vmem [resolvable:$true] %s39
      %42 = dma.hbm_to_vmem [thread:$0]  %s2, 128, %s40, [#allocation6]
    $region13: #{tpu_custom_call.1} parent=1 // pred_fallthru
      _
    // Predicated region
    $region14: #{tpu_custom_call.1} parent=1 // pred_check
      _
    $region15: #{tpu_custom_call.1} parent=1 // pred_check_branch
      %44 = sbr.rel (0) target = $region17
    $region16: #{tpu_custom_call.1} parent=1 // pred_region
      %s46 = ssub.s32 128, 128
      %47 = vsyncadd [#allocation9], %s46
      %s49 = sshll.u32 [#allocation8], 4
      %s50 = int_to_ptr.vmem [resolvable:$true] %s49
      %52 = dma.hbm_to_vmem [thread:$0]  %s3, 128, %s50, [#allocation9]
    $region17: #{tpu_custom_call.1} parent=1 // pred_fallthru
      _
    // Predicated region
    $region18: #{tpu_custom_call.1} parent=1 // pred_check
      _
    $region19: #{tpu_custom_call.1} parent=1 // pred_check_branch
      %54 = sbr.rel (0) target = $region21
    $region20: #{tpu_custom_call.1} parent=1 // pred_region
      %55 = dma.done [#allocation3], 256
    $region21: #{tpu_custom_call.1} parent=1 // pred_fallthru
      _
    // Predicated region
    $region22: #{tpu_custom_call.1} parent=1 // pred_check
      _
    $region23: #{tpu_custom_call.1} parent=1 // pred_check_branch
      %57 = sbr.rel (0) target = $region25
    $region24: #{tpu_custom_call.1} parent=1 // pred_region
      %58 = dma.done [#allocation6], 128
    $region25: #{tpu_custom_call.1} parent=1 // pred_fallthru
      _
    // Predicated region
    $region26: #{tpu_custom_call.1} parent=1 // pred_check
      _
    $region27: #{tpu_custom_call.1} parent=1 // pred_check_branch
      %60 = sbr.rel (0) target = $region29
    $region28: #{tpu_custom_call.1} parent=1 // pred_region
      %61 = dma.done [#allocation6], 128
    $region29: #{tpu_custom_call.1} parent=1 // pred_fallthru
      _
    // Predicated region
    $region30: #{tpu_custom_call.1} parent=1 // pred_check
      _
    $region31: #{tpu_custom_call.1} parent=1 // pred_check_branch
      %63 = sbr.rel (0) target = $region33
    $region32: #{tpu_custom_call.1} parent=1 // pred_region
      %64 = dma.done [#allocation9], 128
    $region33: #{tpu_custom_call.1} parent=1 // pred_fallthru
      _
    %v65 = vld [vmem:[#allocation2] sm:$0xff]
    %v66 = vld [vmem:[#allocation2 + $0x8] sm:$0xff]
    %v67 = vsub.f32 0.0, %v65
    %v68 = vsub.f32 0.0, %v66
    %v69 = vld [vmem:[#allocation5] sm:$0xff]
    %v70 = vld [vmem:[#allocation7] sm:$0xff]
    %72 = vset.pattern.permute.xlu0 0
    %73 = vperm.xlu0 %72, %v69
    %v74 = vpop.permute.xlu0 %73
    %vm76 = vcmp.gt.f32.partialorder %v67, %v74
    %vm77 = vcmp.gt.f32.partialorder %v68, %v74
    %79 = vset.pattern.permute.xlu0 0
    %80 = vperm.xlu0 %79, %v70
    %v81 = vpop.permute.xlu0 %80
    %v83 = vsel %vm76, %v67, %v81
    %v84 = vsel %vm77, %v68, %v81
    %85 = vset.pattern.permute.xlu0 1
    %86 = vperm.xlu0 %85, %v69
    %v87 = vpop.permute.xlu0 %86
    %vm89 = vcmp.gt.f32.partialorder %v83, %v87
    %vm90 = vcmp.gt.f32.partialorder %v84, %v87
    %91 = vset.pattern.permute.xlu0 1
    %92 = vperm.xlu0 %91, %v70
    %v93 = vpop.permute.xlu0 %92
    %v95 = vsel %vm89, %v83, %v93
    %v96 = vsel %vm90, %v84, %v93
    %97 = vset.pattern.permute.xlu0 2
    %98 = vperm.xlu0 %97, %v69
    %v99 = vpop.permute.xlu0 %98
    %vm101 = vcmp.gt.f32.partialorder %v95, %v99
    %vm102 = vcmp.gt.f32.partialorder %v96, %v99
    %103 = vset.pattern.permute.xlu0 2
    %104 = vperm.xlu0 %103, %v70
    %v105 = vpop.permute.xlu0 %104
    %v107 = vsel %vm101, %v95, %v105
    %v108 = vsel %vm102, %v96, %v105
    %109 = vset.pattern.permute.xlu0 3
    %110 = vperm.xlu0 %109, %v69
    %v111 = vpop.permute.xlu0 %110
    %vm113 = vcmp.gt.f32.partialorder %v107, %v111
    %vm114 = vcmp.gt.f32.partialorder %v108, %v111
    %115 = vset.pattern.permute.xlu0 3
    %116 = vperm.xlu0 %115, %v70
    %v117 = vpop.permute.xlu0 %116
    %v119 = vsel %vm113, %v107, %v117
    %v120 = vsel %vm114, %v108, %v117
    %121 = vset.pattern.permute.xlu0 4
    %122 = vperm.xlu0 %121, %v69
    %v123 = vpop.permute.xlu0 %122
    %vm125 = vcmp.gt.f32.partialorder %v119, %v123
    %vm126 = vcmp.gt.f32.partialorder %v120, %v123
    %127 = vset.pattern.permute.xlu0 4
    %128 = vperm.xlu0 %127, %v70
    %v129 = vpop.permute.xlu0 %128
    %v131 = vsel %vm125, %v119, %v129
    %v132 = vsel %vm126, %v120, %v129
    %133 = vset.pattern.permute.xlu0 5
    %134 = vperm.xlu0 %133, %v69
    %v135 = vpop.permute.xlu0 %134
    %vm137 = vcmp.gt.f32.partialorder %v131, %v135
    %vm138 = vcmp.gt.f32.partialorder %v132, %v135
    %139 = vset.pattern.permute.xlu0 5
    %140 = vperm.xlu0 %139, %v70
    %v141 = vpop.permute.xlu0 %140
    %v143 = vsel %vm137, %v131, %v141
    %v144 = vsel %vm138, %v132, %v141
    %145 = vset.pattern.permute.xlu0 6
    %146 = vperm.xlu0 %145, %v69
    %v147 = vpop.permute.xlu0 %146
    %vm149 = vcmp.gt.f32.partialorder %v143, %v147
    %vm150 = vcmp.gt.f32.partialorder %v144, %v147
    %151 = vset.pattern.permute.xlu0 6
    %152 = vperm.xlu0 %151, %v70
    %v153 = vpop.permute.xlu0 %152
    %v155 = vsel %vm149, %v143, %v153
    %v156 = vsel %vm150, %v144, %v153
    %v157 = vld [vmem:[#allocation8] sm:$0xff]
    %vm158 = vcmp.gt.f32.partialorder %v157, 0.5
    %v159 = vsel %vm158, 1, 0
    %160 = vset.pattern.permute.xlu0 0
    %161 = vperm.xlu0 %160, %v159
    %v162 = vpop.permute.xlu0 %161
    %vm163 = vcmp.eq.s32.totalorder %v162, 1
    %v164 = vsel %vm163, %v155, %v67
    %v165 = vsel %vm163, %v156, %v68
    %166 = vst [vmem:[#allocation10] sm:$0xff] %v164
    %167 = vst [vmem:[#allocation10 + $0x8] sm:$0xff] %v165
    // Predicated region
    $region34: #{tpu_custom_call.1} parent=1 // pred_check
      _
    $region35: #{tpu_custom_call.1} parent=1 // pred_check_branch
      %169 = sbr.rel (0) target = $region37
    $region36: #{tpu_custom_call.1} parent=1 // pred_region
      %s171 = ssub.s32 256, 256
      %172 = vsyncadd [#allocation4], %s171
      %s174 = sshll.u32 [#allocation10], 4
      %s175 = int_to_ptr.vmem [resolvable:$true] %s174
      %177 = dma.vmem_to_hbm [thread:$0]  %s175, 256, %s4, [#allocation4]
    $region37: #{tpu_custom_call.1} parent=1 // pred_fallthru
      _
    // Predicated region
    $region38: #{tpu_custom_call.1} parent=1 // pred_check
      _
    $region39: #{tpu_custom_call.1} parent=1 // pred_check_branch
      %179 = sbr.rel (0) target = $region41
    $region40: #{tpu_custom_call.1} parent=1 // pred_region
      %180 = dma.done [#allocation4], 256
    $region41: #{tpu_custom_call.1} parent=1 // pred_fallthru
      _
    %181 = vsyncpa [#allocation3], 1
    %182 = vsyncpa [#allocation6], 1
    %183 = vsyncpa [#allocation9], 1
    %184 = vsyncpa [#allocation4], 1

</llo_original>
